<compile_context>
chip_gen: v6e
topology: v6e:2x2x1
jax: 0.10.0
libtpu: 0.0.40
codegen_flags: <defaults>
</compile_context>

<pallas_src>
import functools

import numpy as np
import jax
import jax.numpy as jnp
from jax import lax
from jax.experimental import pallas as pl
from jax.experimental.pallas import tpu as pltpu

EPS = 1e-5  # nn.InstanceNorm2d default


def _conv_in_kernel(x_ref, w_ref, mask_ref, o_ref, *, tap_offsets, inv_count):
    # x_ref:    (1, C_in, T)           bf16  flattened zero-padded image (+ tail)
    # w_ref:    (KH*KW, C_out, C_in)   bf16  tap-major weights
    # mask_ref: (1, L_pad)             f32   1.0 on valid output positions
    # o_ref:    (1, C_out, L_pad)      f32   "wide" normalized output
    c_out, l_pad = o_ref.shape[1], o_ref.shape[2]
    x = x_ref[0]                                          # (C_in, T) bf16

    # Shift-and-matmul convolution, f32 accumulation on the MXU.
    acc = jnp.zeros((c_out, l_pad), jnp.float32)
    for t, off in enumerate(tap_offsets):                 # static unroll (KH*KW)
        acc = acc + jnp.dot(w_ref[t], x[:, off:off + l_pad],
                            preferred_element_type=jnp.float32)

    # Single-pass masked instance-norm stats: var = E[y^2] - mean^2.
    mask = mask_ref[...]                                  # (1, L_pad) {0,1}
    ym = acc * mask
    mean = jnp.sum(ym, axis=1, keepdims=True) * inv_count       # (C_out, 1)
    ex2 = jnp.sum(ym * ym, axis=1, keepdims=True) * inv_count   # (C_out, 1)
    var = jnp.maximum(ex2 - mean * mean, 0.0)
    o_ref[0] = ((acc - mean) * lax.rsqrt(var + EPS)).astype(o_ref.dtype)


def _round_up(v, m):
    return (v + m - 1) // m * m


@functools.partial(jax.jit, static_argnames=("stride", "padding"))
def conv_instance_norm2d(x, weight, bias=None, *, stride=(1, 1), padding=(0, 0)):
    """x: (N, C_in, H, W); weight: (C_out, C_in, KH, KW).

    `bias` is accepted for API parity but mathematically cancelled by the
    affine-free instance norm, so it is not used (exact simplification).
    """
    del bias
    n, c_in, h, w = x.shape
    c_out, _, kh, kw = weight.shape
    sh, sw = stride
    ph, pw = padding

    h_p, w_p = h + 2 * ph, w + 2 * pw
    ho1, wo1 = h_p - kh + 1, w_p - kw + 1          # stride-1 ("wide") output dims
    h_out = (h_p - kh) // sh + 1
    w_out = (w_p - kw) // sw + 1

    l_valid = ho1 * w_p                            # wide rows keep the W_p pitch
    l_pad = _round_up(l_valid, 128)                # lane-dense output slab
    max_off = (kh - 1) * w_p + (kw - 1)
    t_len = _round_up(l_pad + max_off, 128)        # flat input length incl. zero tail

    # --- wrapper-side layout plumbing (no KH*KW inflation) ---
    xp = jnp.pad(x, ((0, 0), (0, 0), (ph, ph), (pw, pw)))
    xflat = xp.reshape(n, c_in, h_p * w_p)
    xflat = jnp.pad(xflat, ((0, 0), (0, 0), (0, t_len - h_p * w_p)))
    xflat = xflat.astype(jnp.bfloat16)
    w_taps = jnp.transpose(weight, (2, 3, 0, 1)).reshape(kh * kw, c_out, c_in)
    w_taps = w_taps.astype(jnp.bfloat16)

    # Validity mask over the wide flat layout (encodes stride + column crop).
    m2 = np.zeros((ho1, w_p), np.float32)
    m2[::sh, 0:wo1:sw] = 1.0
    mask_np = np.zeros((1, l_pad), np.float32)
    mask_np[0, :l_valid] = m2.reshape(-1)
    mask = jnp.asarray(mask_np)

    tap_offsets = tuple(i * w_p + j for i in range(kh) for j in range(kw))
    kernel = functools.partial(_conv_in_kernel,
                               tap_offsets=tap_offsets,
                               inv_count=1.0 / float(h_out * w_out))

    out_wide = pl.pallas_call(
        kernel,
        out_shape=jax.ShapeDtypeStruct((n, c_out, l_pad), jnp.float32),
        grid_spec=pltpu.PrefetchScalarGridSpec(
            num_scalar_prefetch=0,
            grid=(n,),
            in_specs=[
                pl.BlockSpec((1, c_in, t_len), lambda i: (i, 0, 0)),
                pl.BlockSpec((kh * kw, c_out, c_in), lambda i: (0, 0, 0)),
                pl.BlockSpec((1, l_pad), lambda i: (0, 0)),
            ],
            out_specs=pl.BlockSpec((1, c_out, l_pad), lambda i: (i, 0, 0)),
        ),
        compiler_params=pltpu.CompilerParams(
            dimension_semantics=("parallel",),
            vmem_limit_bytes=48 * 1024 * 1024),
    )(xflat, w_taps, mask)

    # Crop the wide columns / apply stride, back to NCHW.
    y = out_wide[:, :, :l_valid].reshape(n, c_out, ho1, w_p)
    return y[:, :, ::sh, :wo1:sw]


def _reference(x, weight, bias, stride, padding):
    y = lax.conv_general_dilated(
        x, weight, window_strides=stride,
        padding=[(padding[0], padding[0]), (padding[1], padding[1])],
        dimension_numbers=("NCHW", "OIHW", "NCHW"))
    y = y + bias.reshape(1, -1, 1, 1)
    mean = jnp.mean(y, axis=(2, 3), keepdims=True)
    var = jnp.mean((y - mean) ** 2, axis=(2, 3), keepdims=True)
    return (y - mean) / jnp.sqrt(var + EPS)


if __name__ == "__main__":
    # Module config: ConvInstanceNorm2d(in_channels=4, out_channels=8,
    #                                   kernel_size=3, stride=1, padding=1)
    N, C_IN, H, W = 2, 4, 16, 16
    C_OUT, KH, KW = 8, 3, 3
    STRIDE, PAD = (1, 1), (1, 1)

    key = jax.random.PRNGKey(0)
    kx, kw_, kb = jax.random.split(key, 3)
    x = jax.random.normal(kx, (N, C_IN, H, W), dtype=jnp.float32)
    fan_in = C_IN * KH * KW
    bound = 1.0 / (fan_in ** 0.5)  # deterministic, PyTorch-style uniform bounds
    weight = jax.random.uniform(kw_, (C_OUT, C_IN, KH, KW),
                                minval=-bound, maxval=bound, dtype=jnp.float32)
    bias = jax.random.uniform(kb, (C_OUT,), minval=-bound, maxval=bound,
                              dtype=jnp.float32)

    out = conv_instance_norm2d(x, weight, bias, stride=STRIDE, padding=PAD)
    out = jax.block_until_ready(out)
    assert out.shape == (N, C_OUT, H, W)

    # Tight check: reference whose conv inputs see the same bf16 rounding as the
    # kernel's MXU operands (accumulation stays f32 in both).
    x_r = x.astype(jnp.bfloat16).astype(jnp.float32)
    w_r = weight.astype(jnp.bfloat16).astype(jnp.float32)
    ref_bf16 = _reference(x_r, w_r, bias, STRIDE, PAD)
    assert jnp.allclose(out, ref_bf16, atol=2e-3, rtol=2e-3)

    # Loose check against full-f32 module semantics (bf16 operand rounding only).
    ref_f32 = _reference(x, weight, bias, STRIDE, PAD)
    assert jnp.allclose(out, ref_f32, atol=5e-2, rtol=5e-2)

    print("KERNEL_OK")
</pallas_src>

<mosaic_0001>
module attributes {stable_mosaic.version = 11 : i64} {
  func.func @_conv_in_kernel(%arg0: i32, %arg1: memref<1x4x512xbf16, #tpu.memory_space<vmem>>, %arg2: memref<9x8x4xbf16, #tpu.memory_space<vmem>>, %arg3: memref<1x384xf32, #tpu.memory_space<vmem>>, %arg4: memref<1x8x384xf32, #tpu.memory_space<vmem>>) attributes {dimension_semantics = [#tpu.dimension_semantics<parallel>], iteration_bounds = array<i64: 2>, scalar_prefetch = 0 : i64, scratch_operands = 0 : i64, tpu.core_type = #tpu.core_type<tc>, window_params = [{transform_indices = @transform_0, window_bounds = array<i64: 1, 4, 512>}, {pipeline_mode = #tpu.pipeline_mode<synchronous>, transform_indices = @transform_1, window_bounds = array<i64: 9, 8, 4>}, {pipeline_mode = #tpu.pipeline_mode<synchronous>, transform_indices = @transform_2, window_bounds = array<i64: 1, 384>}, {transform_indices = @transform_3, window_bounds = array<i64: 1, 8, 384>}]} {
    %c0 = arith.constant 0 : index
    %c0_0 = arith.constant 0 : index
    %c0_1 = arith.constant 0 : index
    %0 = vector.load %arg1[%c0, %c0_0, %c0_1] : memref<1x4x512xbf16, #tpu.memory_space<vmem>>, vector<1x4x512xbf16>
    %1 = vector.shape_cast %0 : vector<1x4x512xbf16> to vector<4x512xbf16>
    %cst = arith.constant 0.000000e+00 : f32
    %2 = vector.broadcast %cst : f32 to vector<8x384xf32>
    %c0_2 = arith.constant 0 : index
    %c0_3 = arith.constant 0 : index
    %c0_4 = arith.constant 0 : index
    %3 = vector.load %arg2[%c0_2, %c0_3, %c0_4] : memref<9x8x4xbf16, #tpu.memory_space<vmem>>, vector<1x8x4xbf16>
    %4 = vector.shape_cast %3 : vector<1x8x4xbf16> to vector<8x4xbf16>
    %5 = vector.extract_strided_slice %1 {offsets = [0, 0], sizes = [4, 384], strides = [1, 1]} : vector<4x512xbf16> to vector<4x384xbf16>
    %cst_5 = arith.constant dense<0.000000e+00> : vector<8x384xf32>
    %6 = tpu.matmul %4, %5, %cst_5 {dimension_numbers = #tpu.dot_dimension_numbers<[1], [0], [0], [1], [0, 0, 1, 1], [], []>} : vector<8x4xbf16>, vector<4x384xbf16>, vector<8x384xf32> -> vector<8x384xf32>
    %7 = arith.addf %2, %6 : vector<8x384xf32>
    %c1 = arith.constant 1 : index
    %c0_6 = arith.constant 0 : index
    %c0_7 = arith.constant 0 : index
    %8 = vector.load %arg2[%c1, %c0_6, %c0_7] : memref<9x8x4xbf16, #tpu.memory_space<vmem>>, vector<1x8x4xbf16>
    %9 = vector.shape_cast %8 : vector<1x8x4xbf16> to vector<8x4xbf16>
    %10 = vector.extract_strided_slice %1 {offsets = [0, 1], sizes = [4, 384], strides = [1, 1]} : vector<4x512xbf16> to vector<4x384xbf16>
    %cst_8 = arith.constant dense<0.000000e+00> : vector<8x384xf32>
    %11 = tpu.matmul %9, %10, %cst_8 {dimension_numbers = #tpu.dot_dimension_numbers<[1], [0], [0], [1], [0, 0, 1, 1], [], []>} : vector<8x4xbf16>, vector<4x384xbf16>, vector<8x384xf32> -> vector<8x384xf32>
    %12 = arith.addf %7, %11 : vector<8x384xf32>
    %c2 = arith.constant 2 : index
    %c0_9 = arith.constant 0 : index
    %c0_10 = arith.constant 0 : index
    %13 = vector.load %arg2[%c2, %c0_9, %c0_10] : memref<9x8x4xbf16, #tpu.memory_space<vmem>>, vector<1x8x4xbf16>
    %14 = vector.shape_cast %13 : vector<1x8x4xbf16> to vector<8x4xbf16>
    %15 = vector.extract_strided_slice %1 {offsets = [0, 2], sizes = [4, 384], strides = [1, 1]} : vector<4x512xbf16> to vector<4x384xbf16>
    %cst_11 = arith.constant dense<0.000000e+00> : vector<8x384xf32>
    %16 = tpu.matmul %14, %15, %cst_11 {dimension_numbers = #tpu.dot_dimension_numbers<[1], [0], [0], [1], [0, 0, 1, 1], [], []>} : vector<8x4xbf16>, vector<4x384xbf16>, vector<8x384xf32> -> vector<8x384xf32>
    %17 = arith.addf %12, %16 : vector<8x384xf32>
    %c3 = arith.constant 3 : index
    %c0_12 = arith.constant 0 : index
    %c0_13 = arith.constant 0 : index
    %18 = vector.load %arg2[%c3, %c0_12, %c0_13] : memref<9x8x4xbf16, #tpu.memory_space<vmem>>, vector<1x8x4xbf16>
    %19 = vector.shape_cast %18 : vector<1x8x4xbf16> to vector<8x4xbf16>
    %20 = vector.extract_strided_slice %1 {offsets = [0, 18], sizes = [4, 384], strides = [1, 1]} : vector<4x512xbf16> to vector<4x384xbf16>
    %cst_14 = arith.constant dense<0.000000e+00> : vector<8x384xf32>
    %21 = tpu.matmul %19, %20, %cst_14 {dimension_numbers = #tpu.dot_dimension_numbers<[1], [0], [0], [1], [0, 0, 1, 1], [], []>} : vector<8x4xbf16>, vector<4x384xbf16>, vector<8x384xf32> -> vector<8x384xf32>
    %22 = arith.addf %17, %21 : vector<8x384xf32>
    %c4 = arith.constant 4 : index
    %c0_15 = arith.constant 0 : index
    %c0_16 = arith.constant 0 : index
    %23 = vector.load %arg2[%c4, %c0_15, %c0_16] : memref<9x8x4xbf16, #tpu.memory_space<vmem>>, vector<1x8x4xbf16>
    %24 = vector.shape_cast %23 : vector<1x8x4xbf16> to vector<8x4xbf16>
    %25 = vector.extract_strided_slice %1 {offsets = [0, 19], sizes = [4, 384], strides = [1, 1]} : vector<4x512xbf16> to vector<4x384xbf16>
    %cst_17 = arith.constant dense<0.000000e+00> : vector<8x384xf32>
    %26 = tpu.matmul %24, %25, %cst_17 {dimension_numbers = #tpu.dot_dimension_numbers<[1], [0], [0], [1], [0, 0, 1, 1], [], []>} : vector<8x4xbf16>, vector<4x384xbf16>, vector<8x384xf32> -> vector<8x384xf32>
    %27 = arith.addf %22, %26 : vector<8x384xf32>
    %c5 = arith.constant 5 : index
    %c0_18 = arith.constant 0 : index
    %c0_19 = arith.constant 0 : index
    %28 = vector.load %arg2[%c5, %c0_18, %c0_19] : memref<9x8x4xbf16, #tpu.memory_space<vmem>>, vector<1x8x4xbf16>
    %29 = vector.shape_cast %28 : vector<1x8x4xbf16> to vector<8x4xbf16>
    %30 = vector.extract_strided_slice %1 {offsets = [0, 20], sizes = [4, 384], strides = [1, 1]} : vector<4x512xbf16> to vector<4x384xbf16>
    %cst_20 = arith.constant dense<0.000000e+00> : vector<8x384xf32>
    %31 = tpu.matmul %29, %30, %cst_20 {dimension_numbers = #tpu.dot_dimension_numbers<[1], [0], [0], [1], [0, 0, 1, 1], [], []>} : vector<8x4xbf16>, vector<4x384xbf16>, vector<8x384xf32> -> vector<8x384xf32>
    %32 = arith.addf %27, %31 : vector<8x384xf32>
    %c6 = arith.constant 6 : index
    %c0_21 = arith.constant 0 : index
    %c0_22 = arith.constant 0 : index
    %33 = vector.load %arg2[%c6, %c0_21, %c0_22] : memref<9x8x4xbf16, #tpu.memory_space<vmem>>, vector<1x8x4xbf16>
    %34 = vector.shape_cast %33 : vector<1x8x4xbf16> to vector<8x4xbf16>
    %35 = vector.extract_strided_slice %1 {offsets = [0, 36], sizes = [4, 384], strides = [1, 1]} : vector<4x512xbf16> to vector<4x384xbf16>
    %cst_23 = arith.constant dense<0.000000e+00> : vector<8x384xf32>
    %36 = tpu.matmul %34, %35, %cst_23 {dimension_numbers = #tpu.dot_dimension_numbers<[1], [0], [0], [1], [0, 0, 1, 1], [], []>} : vector<8x4xbf16>, vector<4x384xbf16>, vector<8x384xf32> -> vector<8x384xf32>
    %37 = arith.addf %32, %36 : vector<8x384xf32>
    %c7 = arith.constant 7 : index
    %c0_24 = arith.constant 0 : index
    %c0_25 = arith.constant 0 : index
    %38 = vector.load %arg2[%c7, %c0_24, %c0_25] : memref<9x8x4xbf16, #tpu.memory_space<vmem>>, vector<1x8x4xbf16>
    %39 = vector.shape_cast %38 : vector<1x8x4xbf16> to vector<8x4xbf16>
    %40 = vector.extract_strided_slice %1 {offsets = [0, 37], sizes = [4, 384], strides = [1, 1]} : vector<4x512xbf16> to vector<4x384xbf16>
    %cst_26 = arith.constant dense<0.000000e+00> : vector<8x384xf32>
    %41 = tpu.matmul %39, %40, %cst_26 {dimension_numbers = #tpu.dot_dimension_numbers<[1], [0], [0], [1], [0, 0, 1, 1], [], []>} : vector<8x4xbf16>, vector<4x384xbf16>, vector<8x384xf32> -> vector<8x384xf32>
    %42 = arith.addf %37, %41 : vector<8x384xf32>
    %c8 = arith.constant 8 : index
    %c0_27 = arith.constant 0 : index
    %c0_28 = arith.constant 0 : index
    %43 = vector.load %arg2[%c8, %c0_27, %c0_28] : memref<9x8x4xbf16, #tpu.memory_space<vmem>>, vector<1x8x4xbf16>
    %44 = vector.shape_cast %43 : vector<1x8x4xbf16> to vector<8x4xbf16>
    %45 = vector.extract_strided_slice %1 {offsets = [0, 38], sizes = [4, 384], strides = [1, 1]} : vector<4x512xbf16> to vector<4x384xbf16>
    %cst_29 = arith.constant dense<0.000000e+00> : vector<8x384xf32>
    %46 = tpu.matmul %44, %45, %cst_29 {dimension_numbers = #tpu.dot_dimension_numbers<[1], [0], [0], [1], [0, 0, 1, 1], [], []>} : vector<8x4xbf16>, vector<4x384xbf16>, vector<8x384xf32> -> vector<8x384xf32>
    %47 = arith.addf %42, %46 : vector<8x384xf32>
    %c0_30 = arith.constant 0 : index
    %c0_31 = arith.constant 0 : index
    %48 = vector.load %arg3[%c0_30, %c0_31] : memref<1x384xf32, #tpu.memory_space<vmem>>, vector<1x384xf32>
    %49 = vector.broadcast %48 : vector<1x384xf32> to vector<8x384xf32>
    %50 = arith.mulf %47, %49 : vector<8x384xf32>
    %cst_32 = arith.constant dense<0.000000e+00> : vector<8xf32>
    %51 = vector.multi_reduction <add>, %50, %cst_32 [1] : vector<8x384xf32> to vector<8xf32>
    %52 = vector.shape_cast %51 : vector<8xf32> to vector<8x1xf32>
    %cst_33 = arith.constant 3.906250e-03 : f32
    %53 = vector.broadcast %cst_33 : f32 to vector<8x1xf32>
    %54 = arith.mulf %52, %53 : vector<8x1xf32>
    %55 = arith.mulf %50, %50 : vector<8x384xf32>
    %cst_34 = arith.constant dense<0.000000e+00> : vector<8xf32>
    %56 = vector.multi_reduction <add>, %55, %cst_34 [1] : vector<8x384xf32> to vector<8xf32>
    %57 = vector.shape_cast %56 : vector<8xf32> to vector<8x1xf32>
    %cst_35 = arith.constant 3.906250e-03 : f32
    %58 = vector.broadcast %cst_35 : f32 to vector<8x1xf32>
    %59 = arith.mulf %57, %58 : vector<8x1xf32>
    %60 = arith.mulf %54, %54 : vector<8x1xf32>
    %61 = arith.subf %59, %60 : vector<8x1xf32>
    %cst_36 = arith.constant 0.000000e+00 : f32
    %62 = vector.broadcast %cst_36 : f32 to vector<8x1xf32>
    %63 = arith.maximumf %61, %62 : vector<8x1xf32>
    %64 = vector.broadcast %54 : vector<8x1xf32> to vector<8x384xf32>
    %65 = arith.subf %47, %64 : vector<8x384xf32>
    %cst_37 = arith.constant 9.99999974E-6 : f32
    %66 = vector.broadcast %cst_37 : f32 to vector<8x1xf32>
    %67 = arith.addf %63, %66 : vector<8x1xf32>
    %68 = math.rsqrt %67 : vector<8x1xf32>
    %69 = vector.broadcast %68 : vector<8x1xf32> to vector<8x384xf32>
    %70 = arith.mulf %65, %69 : vector<8x384xf32>
    %c0_38 = arith.constant 0 : index
    %c0_39 = arith.constant 0 : index
    %c0_40 = arith.constant 0 : index
    %71 = vector.load %arg4[%c0_38, %c0_39, %c0_40] : memref<1x8x384xf32, #tpu.memory_space<vmem>>, vector<1x8x384xf32>
    %72 = vector.shape_cast %71 : vector<1x8x384xf32> to vector<8x384xf32>
    %73 = vector.shape_cast %70 : vector<8x384xf32> to vector<1x8x384xf32>
    tpu.vector_store %arg4[%c0_38, %c0_39, %c0_40], %73 {strides = array<i32>} : memref<1x8x384xf32, #tpu.memory_space<vmem>>, vector<1x8x384xf32>,
    return
  }
  func.func @transform_0(%arg0: i32) -> (i32, i32, i32) {
    %c0_i32 = arith.constant 0 : i32
    %c0_i32_0 = arith.constant 0 : i32
    %c0_i32_1 = arith.constant 0 : i32
    return %arg0, %c0_i32, %c0_i32_0 : i32, i32, i32
  }
  func.func @transform_1(%arg0: i32) -> (i32, i32, i32) {
    %c0_i32 = arith.constant 0 : i32
    %c0_i32_0 = arith.constant 0 : i32
    %c0_i32_1 = arith.constant 0 : i32
    %c0_i32_2 = arith.constant 0 : i32
    return %c0_i32, %c0_i32_0, %c0_i32_1 : i32, i32, i32
  }
  func.func @transform_2(%arg0: i32) -> (i32, i32) {
    %c0_i32 = arith.constant 0 : i32
    %c0_i32_0 = arith.constant 0 : i32
    %c0_i32_1 = arith.constant 0 : i32
    return %c0_i32, %c0_i32_0 : i32, i32
  }
  func.func @transform_3(%arg0: i32) -> (i32, i32, i32) {
    %c0_i32 = arith.constant 0 : i32
    %c0_i32_0 = arith.constant 0 : i32
    %c0_i32_1 = arith.constant 0 : i32
    return %arg0, %c0_i32, %c0_i32_0 : i32, i32, i32
  }
}

</mosaic_0001>

<llo_original>
// kernel: conv_instance_norm2d.1
$region0: #{conv_instance_norm2d.1}
  #allocation0 [shape = 'u32[]', space=smem, size = 0x4, offset = 0x4, fixed_abs, tag = 'smem constant byte address 0x4 - core index']
  #allocation1 [shape = 'u32[144,128]{1,0:T(1,128)}', space=vmem, size = 0x12000, scoped, tag = 'internal scratch']
  %s0 = inlined_call_operand.vmem [shape: bf16[2,4,512], index: 0, kind: input, shape index: {}]
  %s1 = inlined_call_operand.vmem [shape: bf16[9,8,4], index: 1, kind: input, shape index: {}]
  %s2 = inlined_call_operand.vmem [shape: f32[1,384], index: 2, kind: input, shape index: {}]
  %s3 = inlined_call_operand.vmem [shape: f32[2,8,384], index: 3, kind: output, shape index: {}]
  %s4 = sld [smem:[#allocation0]]
  $region45: #{conv_instance_norm2d.1} parent=0
    _
  %s6 = ssub.s32 1, %s4
  %s7 = scalar_select 0, %s6, %s4
  loop: start=0, step=1, limit=4
  $region2: #{conv_instance_norm2d.1} parent=0 // loop_pre_header
    _
  $region3: #{conv_instance_norm2d.1} parent=0 // loop_header
    %s9 = sphi 0, %s13
    %p10 = scmp.ge.s32.totalorder %s9, 4
    %s19 = sphi 0, %s21
    %s22 = sphi 0, %s19
    %s23 = sphi 0, %s22
    %s39 = sphi 0, %s23
    %s43 = sphi 0, %s43
    %s45 = sphi 0, %s43
    %s46 = sphi 0, %s45
    %s60 = sphi 0, %s46
    %s64 = sphi 0, %s64
    %s66 = sphi 0, %s64
    %s67 = sphi 0, %s66
    %s81 = sphi 0, %s67
    %s87 = sphi 0, %s89
    %s90 = sphi 0, %s87
    %s91 = sphi 0, %s90
    %s107 = sphi 0, %s91
  $region4: #{conv_instance_norm2d.1} parent=0 // loop_header_branch
    %12 = sbr.rel (%p10) target = $region8
  $region5: #{conv_instance_norm2d.1} parent=0 // loop_body
    %s14 = ssub.s32 %s9, 1
    %s15 = ssub.s32 %s9, 2
    %s16 = sadd.s32 %s9, 1
    %s17 = ssub.s32 %s9, %s16
    %p18 = scmp.eq.s32.totalorder %s17, 0
    %s20 = sadd.s32 %s19, 1
    %s21 = scalar_select %p18, %s19, %s20
    %p24 = pneg %p18
    %p25 = scmp.eq.s32.totalorder %s9, 1
    %p26 = por %p24, %p25
    %p27 = scmp.ne.s32.totalorder %s19, %s22
    %p28 = scmp.eq.s32.totalorder %s9, 0
    %p29 = por %p27, %p28
    %p30 = scmp.ne.s32.totalorder %s19, %s22
    %p31 = scmp.eq.s32.totalorder %s14, 1
    %p32 = por %p30, %p31
    %p33 = scmp.ne.s32.totalorder %s22, %s23
    %p34 = scmp.eq.s32.totalorder %s14, 0
    %p35 = por %p33, %p34
    %p36 = scmp.ne.s32.totalorder %s22, %s23
    %p37 = scmp.eq.s32.totalorder %s15, 1
    %p38 = por %p36, %p37
    %p40 = scmp.ne.s32.totalorder %s23, %s39
    %p41 = scmp.eq.s32.totalorder %s15, 0
    %p42 = por %p40, %p41
    %s44 = sadd.s32 %s43, 1
    %p47 = scmp.eq.s32.totalorder %s9, 1
    %p48 = scmp.ne.s32.totalorder %s43, %s45
    %p49 = scmp.eq.s32.totalorder %s9, 0
    %p50 = por %p48, %p49
    %p51 = scmp.ne.s32.totalorder %s43, %s45
    %p52 = scmp.eq.s32.totalorder %s14, 1
    %p53 = por %p51, %p52
    %p54 = scmp.ne.s32.totalorder %s45, %s46
    %p55 = scmp.eq.s32.totalorder %s14, 0
    %p56 = por %p54, %p55
    %p57 = scmp.ne.s32.totalorder %s45, %s46
    %p58 = scmp.eq.s32.totalorder %s15, 1
    %p59 = por %p57, %p58
    %p61 = scmp.ne.s32.totalorder %s46, %s60
    %p62 = scmp.eq.s32.totalorder %s15, 0
    %p63 = por %p61, %p62
    %s65 = sadd.s32 %s64, 1
    %p68 = scmp.eq.s32.totalorder %s9, 1
    %p69 = scmp.ne.s32.totalorder %s64, %s66
    %p70 = scmp.eq.s32.totalorder %s9, 0
    %p71 = por %p69, %p70
    %p72 = scmp.ne.s32.totalorder %s64, %s66
    %p73 = scmp.eq.s32.totalorder %s14, 1
    %p74 = por %p72, %p73
    %p75 = scmp.ne.s32.totalorder %s66, %s67
    %p76 = scmp.eq.s32.totalorder %s14, 0
    %p77 = por %p75, %p76
    %p78 = scmp.ne.s32.totalorder %s66, %s67
    %p79 = scmp.eq.s32.totalorder %s15, 1
    %p80 = por %p78, %p79
    %p82 = scmp.ne.s32.totalorder %s67, %s81
    %p83 = scmp.eq.s32.totalorder %s15, 0
    %p84 = por %p82, %p83
    %s85 = ssub.s32 %s9, %s16
    %p86 = scmp.eq.s32.totalorder %s85, 0
    %s88 = sadd.s32 %s87, 1
    %s89 = scalar_select %p86, %s87, %s88
    %p92 = pneg %p86
    %p93 = scmp.eq.s32.totalorder %s9, 1
    %p94 = por %p92, %p93
    %p95 = scmp.ne.s32.totalorder %s87, %s90
    %p96 = scmp.eq.s32.totalorder %s9, 0
    %p97 = por %p95, %p96
    %p98 = scmp.ne.s32.totalorder %s87, %s90
    %p99 = scmp.eq.s32.totalorder %s14, 1
    %p100 = por %p98, %p99
    %p101 = scmp.ne.s32.totalorder %s90, %s91
    %p102 = scmp.eq.s32.totalorder %s14, 0
    %p103 = por %p101, %p102
    %p104 = scmp.ne.s32.totalorder %s90, %s91
    %p105 = scmp.eq.s32.totalorder %s15, 1
    %p106 = por %p104, %p105
    %p108 = scmp.ne.s32.totalorder %s91, %s107
    %p109 = scmp.eq.s32.totalorder %s15, 0
    %p110 = por %p108, %p109
    %p111 = scmp.le.s32.totalorder 1, %s9
    %p112 = scmp.lt.s32.totalorder %s9, 3
    %p113 = pnand %p111, %p112
    %p114 = pneg %p113
    // Predicated region
    $region9: #{conv_instance_norm2d.1} parent=5 // pred_check
      _
    $region10: #{conv_instance_norm2d.1} parent=5 // pred_check_branch
      %116 = sbr.rel (%p113) target = $region12
    $region11: #{conv_instance_norm2d.1} parent=5 // pred_region
      %s117 = ssub.s32 %s9, 1
      // Predicated region
      $region13: #{conv_instance_norm2d.1} parent=11 // pred_check
        %p118 = pneg %p56
      $region14: #{conv_instance_norm2d.1} parent=11 // pred_check_branch
        %120 = sbr.rel (%p118) target = $region16
      $region15: #{conv_instance_norm2d.1} parent=11 // pred_region
        _
      $region16: #{conv_instance_norm2d.1} parent=11 // pred_fallthru
        _
      // Predicated region
      $region17: #{conv_instance_norm2d.1} parent=11 // pred_check
        %p121 = pneg %p77
      $region18: #{conv_instance_norm2d.1} parent=11 // pred_check_branch
        %123 = sbr.rel (%p121) target = $region20
      $region19: #{conv_instance_norm2d.1} parent=11 // pred_region
        _
      $region20: #{conv_instance_norm2d.1} parent=11 // pred_fallthru
        _
    $region12: #{conv_instance_norm2d.1} parent=5 // pred_fallthru
      _
    %p124 = scmp.lt.s32.totalorder %s9, 2
    // Predicated region
    $region21: #{conv_instance_norm2d.1} parent=5 // pred_check
      %p125 = pneg %p124
    $region22: #{conv_instance_norm2d.1} parent=5 // pred_check_branch
      %127 = sbr.rel (%p125) target = $region24
    $region23: #{conv_instance_norm2d.1} parent=5 // pred_region
      // Predicated region
      $region25: #{conv_instance_norm2d.1} parent=23 // pred_check
        %p128 = pneg %p29
      $region26: #{conv_instance_norm2d.1} parent=23 // pred_check_branch
        %130 = sbr.rel (%p128) target = $region28
      $region27: #{conv_instance_norm2d.1} parent=23 // pred_region
        %p131 = scmp.lt.s32.totalorder %s9, 1
        %s132 = scalar_select %p131, %s9, 1
        %s133 = smul.addr %s132, 4
        %s134 = smul.addr %s133, 2
        %s135 = scalar_lea.vmem %s0, %s134
      $region28: #{conv_instance_norm2d.1} parent=23 // pred_fallthru
        _
    $region24: #{conv_instance_norm2d.1} parent=5 // pred_fallthru
      _
    %p136 = scmp.le.s32.totalorder 1, %s9
    %p137 = scmp.lt.s32.totalorder %s9, 3
    %p138 = pnand %p136, %p137
    %p139 = pneg %p138
    // Predicated region
    $region29: #{conv_instance_norm2d.1} parent=5 // pred_check
      _
    $region30: #{conv_instance_norm2d.1} parent=5 // pred_check_branch
      %141 = sbr.rel (%p138) target = $region32
    $region31: #{conv_instance_norm2d.1} parent=5 // pred_region
      %s142 = ssub.s32 %s9, 1
      %p143 = scmp.lt.s32.totalorder %s14, 1
      %s144 = scalar_select %p143, %s14, 1
      %s145 = smul.addr %s144, 4
      %s146 = smul.addr %s145, 2
      %s147 = scalar_lea.vmem %s0, %s146
      %p148 = pneg %p35
      %p149 = pneg %p32
      %p150 = pneg %p56
      %p151 = pneg %p53
      %p152 = pneg %p77
      %p153 = pneg %p74
      %p154 = pneg %p103
      %p155 = pneg %p100
      %p156 = scmp.lt.s32.totalorder %s14, 1
      %s157 = scalar_select %p156, %s14, 1
      %s158 = smul.addr %s157, 3
      %s159 = smul.addr %s158, 8
      %s160 = scalar_lea.vmem %s3, %s159
      %p161 = scmp.lt.s32.totalorder %s14, 1
      %s162 = scalar_select %p161, %s14, 1
      %s163 = smul.addr %s162, 4
      %s164 = smul.addr %s163, 2
      %s165 = scalar_lea.vmem %s0, %s164
      %p166 = scmp.lt.s32.totalorder %s14, 1
      %s167 = scalar_select %p166, %s14, 1
      %s168 = smul.addr %s167, 3
      %s169 = smul.addr %s168, 8
      %s170 = scalar_lea.vmem %s3, %s169
      %v172 = vld [vmem:[%s165] sm:$0xff]
      %v173 = vld [vmem:[%s1] sm:$0xf]
      %s174 = scalar_lea.vmem %s1, 4
      %v175 = vld [vmem:[%s174] sm:$0xf]
      %v177 = vcombine.high %v172, %v172
      %v179 = vunpack.c.l.s4 1983009808
      %v180 = vunpack.c.0.s8 %v179
      %v181 = vlaneseq
      %v182 = vshrl.u32 %v181, 7
      %v183 = vsub.s32 %v180, %v182
      %v184 = vrot.slane %v172, %v183
      %v186 = vunpack.c.l.s4 1983009808
      %v187 = vunpack.c.0.s8 %v186
      %v188 = vlaneseq
      %v189 = vshrl.u32 %v188, 7
      %v190 = vsub.s32 %v187, %v189
      %v191 = vrot.slane %v177, %v190
      %v192 = vcombine.high %v184, %v184
      %v193 = vcombine.high %v191, %v191
      %194 = vrot.lane.b32.xlu0 %v184, 127
      %v195 = vpop.permute.xlu0 %194
      %196 = vrot.lane.b32.xlu0 %v192, 127
      %v197 = vpop.permute.xlu0 %196
      %198 = vrot.lane.b32.xlu0 %v191, 127
      %v199 = vpop.permute.xlu0 %198
      %200 = vrot.lane.b32.xlu0 %v193, 127
      %v201 = vpop.permute.xlu0 %200
      %vm202 = vcmask 1039360
      %v203 = vsel %vm202, %v195, %v197
      %v204 = vsel %vm202, %v197, %v199
      %v205 = vsel %vm202, %v199, %v201
      %vm206 = vcmask 31744
      %v208 = vsel %vm206, %v175, 0
      %vm210 = vcmask 1041408
      %v212 = vsel %vm210, %v203, 0
      %v215 = vsel %vm210, %v204, 0
      %v218 = vsel %vm210, %v205, 0
      %220 = vmatprep.subr.bf16.mxu0 0
      %221 = vmatpush1.bf16.msra.mxu0 0
      %222 = vmatprep.subr.bf16.mxu0 0
      %223 = vmatpush1.bf16.msra.mxu0 0
      %224 = vmatprep.subr.bf16.mxu0 0
      %225 = vmatpush1.bf16.msra.mxu0 0
      %226 = vmatprep.subr.bf16.mxu0 0
      %227 = vmatpush1.bf16.msra.mxu0 0
      %228 = vmatprep.subr.bf16.mxu0 0
      %229 = vmatpush1.bf16.msra.mxu0 0
      %230 = vmatprep.subr.bf16.mxu0 0
      %231 = vmatpush1.bf16.msra.mxu0 0
      %232 = vmatprep.subr.bf16.mxu0 0
      %233 = vmatpush1.bf16.msra.mxu0 0
      %234 = vmatprep.subr.bf16.mxu0 %v215
      %235 = vmatpush1.bf16.msra.mxu0 %v212
      %236 = vmatprep.subr.bf16.mxu0 0
      %237 = vmatpush2.bf16.msra.mxu0 0
      %238 = vmatprep.subr.bf16.mxu0 0
      %239 = vmatpush2.bf16.msra.mxu0 0
      %240 = vmatprep.subr.bf16.mxu0 0
      %241 = vmatpush2.bf16.msra.mxu0 0
      %242 = vmatprep.subr.bf16.mxu0 0
      %243 = vmatpush2.bf16.msra.mxu0 0
      %244 = vmatprep.subr.bf16.mxu0 0
      %245 = vmatpush2.bf16.msra.mxu0 0
      %246 = vmatprep.subr.bf16.mxu0 0
      %247 = vmatpush2.bf16.msra.mxu0 0
      %248 = vmatprep.subr.bf16.mxu0 0
      %249 = vmatpush2.bf16.msra.mxu0 0
      %250 = vmatprep.subr.bf16.mxu0 0
      %251 = vmatpush2.bf16.msra.mxu0 0
      %252 = vmatprep.mubr.bf16.mxu0 0
      %253 = vmatmul.mubr.bf16.gmra.mxu0 %v208
      %v254 = vpop.f32.mrf.mxu0
      %v255 = vadd.f32 0.0, %v254
      %v256 = vpop.f32.mrf.mxu0
      %v257 = vadd.f32 0.0, %v256
      %v258 = vpop.f32.mrf.mxu0
      %v259 = vpop.f32.mrf.mxu0
      %260 = vdwg.mxu0
      %261 = vmatprep.subr.bf16.mxu0 0
      %262 = vmatpush1.bf16.msra.mxu0 0
      %263 = vmatprep.subr.bf16.mxu0 0
      %264 = vmatpush1.bf16.msra.mxu0 0
      %265 = vmatprep.subr.bf16.mxu0 0
      %266 = vmatpush1.bf16.msra.mxu0 0
      %267 = vmatprep.subr.bf16.mxu0 0
      %268 = vmatpush1.bf16.msra.mxu0 0
      %269 = vmatprep.subr.bf16.mxu0 0
      %270 = vmatpush1.bf16.msra.mxu0 0
      %271 = vmatprep.subr.bf16.mxu0 0
      %272 = vmatpush1.bf16.msra.mxu0 0
      %273 = vmatprep.subr.bf16.mxu0 0
      %274 = vmatpush1.bf16.msra.mxu0 0
      %275 = vmatprep.subr.bf16.mxu0 0
      %276 = vmatpush1.bf16.msra.mxu0 %v218
      %277 = vmatprep.subr.bf16.mxu0 0
      %278 = vmatpush2.bf16.msra.mxu0 0
      %279 = vmatprep.subr.bf16.mxu0 0
      %280 = vmatpush2.bf16.msra.mxu0 0
      %281 = vmatprep.subr.bf16.mxu0 0
      %282 = vmatpush2.bf16.msra.mxu0 0
      %283 = vmatprep.subr.bf16.mxu0 0
      %284 = vmatpush2.bf16.msra.mxu0 0
      %285 = vmatprep.subr.bf16.mxu0 0
      %286 = vmatpush2.bf16.msra.mxu0 0
      %287 = vmatprep.subr.bf16.mxu0 0
      %288 = vmatpush2.bf16.msra.mxu0 0
      %289 = vmatprep.subr.bf16.mxu0 0
      %290 = vmatpush2.bf16.msra.mxu0 0
      %291 = vmatprep.subr.bf16.mxu0 0
      %292 = vmatpush2.bf16.msra.mxu0 0
      %293 = vmatprep.mubr.bf16.mxu0 0
      %294 = vmatmul.mubr.bf16.gmra.mxu0 %v208
      %v295 = vpop.f32.mrf.mxu0
      %v296 = vadd.f32 0.0, %v295
      %v297 = vpop.f32.mrf.mxu0
      %v298 = vpop.f32.mrf.mxu0
      %v299 = vpop.f32.mrf.mxu0
      %300 = vdwg.mxu0
      %v302 = vsel %vm206, %v173, 0
      %v305 = vsel %vm210, %v184, 0
      %v308 = vsel %vm210, %v192, 0
      %v311 = vsel %vm210, %v191, 0
      %313 = vmatprep.subr.bf16.mxu0 0
      %314 = vmatpush1.bf16.msra.mxu0 0
      %315 = vmatprep.subr.bf16.mxu0 0
      %316 = vmatpush1.bf16.msra.mxu0 0
      %317 = vmatprep.subr.bf16.mxu0 0
      %318 = vmatpush1.bf16.msra.mxu0 0
      %319 = vmatprep.subr.bf16.mxu0 0
      %320 = vmatpush1.bf16.msra.mxu0 0
      %321 = vmatprep.subr.bf16.mxu0 0
      %322 = vmatpush1.bf16.msra.mxu0 0
      %323 = vmatprep.subr.bf16.mxu0 0
      %324 = vmatpush1.bf16.msra.mxu0 0
      %325 = vmatprep.subr.bf16.mxu0 0
      %326 = vmatpush1.bf16.msra.mxu0 0
      %327 = vmatprep.subr.bf16.mxu0 %v308
      %328 = vmatpush1.bf16.msra.mxu0 %v305
      %329 = vmatprep.subr.bf16.mxu0 0
      %330 = vmatpush2.bf16.msra.mxu0 0
      %331 = vmatprep.subr.bf16.mxu0 0
      %332 = vmatpush2.bf16.msra.mxu0 0
      %333 = vmatprep.subr.bf16.mxu0 0
      %334 = vmatpush2.bf16.msra.mxu0 0
      %335 = vmatprep.subr.bf16.mxu0 0
      %336 = vmatpush2.bf16.msra.mxu0 0
      %337 = vmatprep.subr.bf16.mxu0 0
      %338 = vmatpush2.bf16.msra.mxu0 0
      %339 = vmatprep.subr.bf16.mxu0 0
      %340 = vmatpush2.bf16.msra.mxu0 0
      %341 = vmatprep.subr.bf16.mxu0 0
      %342 = vmatpush2.bf16.msra.mxu0 0
      %343 = vmatprep.subr.bf16.mxu0 0
      %344 = vmatpush2.bf16.msra.mxu0 0
      %345 = vmatprep.mubr.bf16.mxu0 0
      %346 = vmatmul.mubr.bf16.gmra.mxu0 %v302
      %v347 = vpop.f32.mrf.mxu0
      %v348 = vadd.f32 %v255, %v347
      %v349 = vpop.f32.mrf.mxu0
      %v350 = vadd.f32 %v257, %v349
      %v351 = vpop.f32.mrf.mxu0
      %v352 = vpop.f32.mrf.mxu0
      %353 = vdwg.mxu0
      %354 = vmatprep.subr.bf16.mxu0 0
      %355 = vmatpush1.bf16.msra.mxu0 0
      %356 = vmatprep.subr.bf16.mxu0 0
      %357 = vmatpush1.bf16.msra.mxu0 0
      %358 = vmatprep.subr.bf16.mxu0 0
      %359 = vmatpush1.bf16.msra.mxu0 0
      %360 = vmatprep.subr.bf16.mxu0 0
      %361 = vmatpush1.bf16.msra.mxu0 0
      %362 = vmatprep.subr.bf16.mxu0 0
      %363 = vmatpush1.bf16.msra.mxu0 0
      %364 = vmatprep.subr.bf16.mxu0 0
      %365 = vmatpush1.bf16.msra.mxu0 0
      %366 = vmatprep.subr.bf16.mxu0 0
      %367 = vmatpush1.bf16.msra.mxu0 0
      %368 = vmatprep.subr.bf16.mxu0 0
      %369 = vmatpush1.bf16.msra.mxu0 %v311
      %370 = vmatprep.subr.bf16.mxu0 0
      %371 = vmatpush2.bf16.msra.mxu0 0
      %372 = vmatprep.subr.bf16.mxu0 0
      %373 = vmatpush2.bf16.msra.mxu0 0
      %374 = vmatprep.subr.bf16.mxu0 0
      %375 = vmatpush2.bf16.msra.mxu0 0
      %376 = vmatprep.subr.bf16.mxu0 0
      %377 = vmatpush2.bf16.msra.mxu0 0
      %378 = vmatprep.subr.bf16.mxu0 0
      %379 = vmatpush2.bf16.msra.mxu0 0
      %380 = vmatprep.subr.bf16.mxu0 0
      %381 = vmatpush2.bf16.msra.mxu0 0
      %382 = vmatprep.subr.bf16.mxu0 0
      %383 = vmatpush2.bf16.msra.mxu0 0
      %384 = vmatprep.subr.bf16.mxu0 0
      %385 = vmatpush2.bf16.msra.mxu0 0
      %386 = vmatprep.mubr.bf16.mxu0 0
      %387 = vmatmul.mubr.bf16.gmra.mxu0 %v302
      %v388 = vpop.f32.mrf.mxu0
      %v389 = vadd.f32 %v296, %v388
      %v390 = vpop.f32.mrf.mxu0
      %v391 = vpop.f32.mrf.mxu0
      %v392 = vpop.f32.mrf.mxu0
      %393 = vdwg.mxu0
      %s394 = scalar_lea.vmem %s1, 8
      %v395 = vld [vmem:[%s394] sm:$0xf]
      %396 = vrot.lane.b32.xlu0 %v184, 126
      %v397 = vpop.permute.xlu0 %396
      %398 = vrot.lane.b32.xlu0 %v192, 126
      %v399 = vpop.permute.xlu0 %398
      %400 = vrot.lane.b32.xlu0 %v191, 126
      %v401 = vpop.permute.xlu0 %400
      %402 = vrot.lane.b32.xlu0 %v193, 126
      %v403 = vpop.permute.xlu0 %402
      %vm404 = vcmask 1031168
      %v405 = vsel %vm404, %v397, %v399
      %v406 = vsel %vm404, %v399, %v401
      %v407 = vsel %vm404, %v401, %v403
      %v409 = vsel %vm206, %v395, 0
      %v412 = vsel %vm210, %v405, 0
      %v415 = vsel %vm210, %v406, 0
      %v418 = vsel %vm210, %v407, 0
      %420 = vmatprep.subr.bf16.mxu0 0
      %421 = vmatpush1.bf16.msra.mxu0 0
      %422 = vmatprep.subr.bf16.mxu0 0
      %423 = vmatpush1.bf16.msra.mxu0 0
      %424 = vmatprep.subr.bf16.mxu0 0
      %425 = vmatpush1.bf16.msra.mxu0 0
      %426 = vmatprep.subr.bf16.mxu0 0
      %427 = vmatpush1.bf16.msra.mxu0 0
      %428 = vmatprep.subr.bf16.mxu0 0
      %429 = vmatpush1.bf16.msra.mxu0 0
      %430 = vmatprep.subr.bf16.mxu0 0
      %431 = vmatpush1.bf16.msra.mxu0 0
      %432 = vmatprep.subr.bf16.mxu0 0
      %433 = vmatpush1.bf16.msra.mxu0 0
      %434 = vmatprep.subr.bf16.mxu0 %v415
      %435 = vmatpush1.bf16.msra.mxu0 %v412
      %436 = vmatprep.subr.bf16.mxu0 0
      %437 = vmatpush2.bf16.msra.mxu0 0
      %438 = vmatprep.subr.bf16.mxu0 0
      %439 = vmatpush2.bf16.msra.mxu0 0
      %440 = vmatprep.subr.bf16.mxu0 0
      %441 = vmatpush2.bf16.msra.mxu0 0
      %442 = vmatprep.subr.bf16.mxu0 0
      %443 = vmatpush2.bf16.msra.mxu0 0
      %444 = vmatprep.subr.bf16.mxu0 0
      %445 = vmatpush2.bf16.msra.mxu0 0
      %446 = vmatprep.subr.bf16.mxu0 0
      %447 = vmatpush2.bf16.msra.mxu0 0
      %448 = vmatprep.subr.bf16.mxu0 0
      %449 = vmatpush2.bf16.msra.mxu0 0
      %450 = vmatprep.subr.bf16.mxu0 0
      %451 = vmatpush2.bf16.msra.mxu0 0
      %452 = vmatprep.mubr.bf16.mxu0 0
      %453 = vmatmul.mubr.bf16.gmra.mxu0 %v409
      %v454 = vpop.f32.mrf.mxu0
      %v455 = vadd.f32 0.0, %v454
      %v456 = vpop.f32.mrf.mxu0
      %v457 = vadd.f32 0.0, %v456
      %v458 = vpop.f32.mrf.mxu0
      %v459 = vpop.f32.mrf.mxu0
      %460 = vdwg.mxu0
      %461 = vmatprep.subr.bf16.mxu0 0
      %462 = vmatpush1.bf16.msra.mxu0 0
      %463 = vmatprep.subr.bf16.mxu0 0
      %464 = vmatpush1.bf16.msra.mxu0 0
      %465 = vmatprep.subr.bf16.mxu0 0
      %466 = vmatpush1.bf16.msra.mxu0 0
      %467 = vmatprep.subr.bf16.mxu0 0
      %468 = vmatpush1.bf16.msra.mxu0 0
      %469 = vmatprep.subr.bf16.mxu0 0
      %470 = vmatpush1.bf16.msra.mxu0 0
      %471 = vmatprep.subr.bf16.mxu0 0
      %472 = vmatpush1.bf16.msra.mxu0 0
      %473 = vmatprep.subr.bf16.mxu0 0
      %474 = vmatpush1.bf16.msra.mxu0 0
      %475 = vmatprep.subr.bf16.mxu0 0
      %476 = vmatpush1.bf16.msra.mxu0 %v418
      %477 = vmatprep.subr.bf16.mxu0 0
      %478 = vmatpush2.bf16.msra.mxu0 0
      %479 = vmatprep.subr.bf16.mxu0 0
      %480 = vmatpush2.bf16.msra.mxu0 0
      %481 = vmatprep.subr.bf16.mxu0 0
      %482 = vmatpush2.bf16.msra.mxu0 0
      %483 = vmatprep.subr.bf16.mxu0 0
      %484 = vmatpush2.bf16.msra.mxu0 0
      %485 = vmatprep.subr.bf16.mxu0 0
      %486 = vmatpush2.bf16.msra.mxu0 0
      %487 = vmatprep.subr.bf16.mxu0 0
      %488 = vmatpush2.bf16.msra.mxu0 0
      %489 = vmatprep.subr.bf16.mxu0 0
      %490 = vmatpush2.bf16.msra.mxu0 0
      %491 = vmatprep.subr.bf16.mxu0 0
      %492 = vmatpush2.bf16.msra.mxu0 0
      %493 = vmatprep.mubr.bf16.mxu0 0
      %494 = vmatmul.mubr.bf16.gmra.mxu0 %v409
      %v495 = vpop.f32.mrf.mxu0
      %v496 = vadd.f32 0.0, %v495
      %v497 = vpop.f32.mrf.mxu0
      %v498 = vpop.f32.mrf.mxu0
      %v499 = vpop.f32.mrf.mxu0
      %500 = vdwg.mxu0
      %v501 = vadd.f32 %v348, %v455
      %v502 = vadd.f32 %v350, %v457
      %v503 = vadd.f32 %v389, %v496
      %s504 = scalar_lea.vmem %s1, 12
      %v505 = vld [vmem:[%s504] sm:$0xf]
      %506 = vrot.lane.b32.xlu0 %v184, 110
      %v507 = vpop.permute.xlu0 %506
      %508 = vrot.lane.b32.xlu0 %v192, 110
      %v509 = vpop.permute.xlu0 %508
      %510 = vrot.lane.b32.xlu0 %v191, 110
      %v511 = vpop.permute.xlu0 %510
      %512 = vrot.lane.b32.xlu0 %v193, 110
      %v513 = vpop.permute.xlu0 %512
      %vm514 = vcmask 900096
      %v515 = vsel %vm514, %v507, %v509
      %v516 = vsel %vm514, %v509, %v511
      %v517 = vsel %vm514, %v511, %v513
      %v519 = vsel %vm206, %v505, 0
      %v522 = vsel %vm210, %v515, 0
      %v525 = vsel %vm210, %v516, 0
      %v528 = vsel %vm210, %v517, 0
      %530 = vmatprep.subr.bf16.mxu0 0
      %531 = vmatpush1.bf16.msra.mxu0 0
      %532 = vmatprep.subr.bf16.mxu0 0
      %533 = vmatpush1.bf16.msra.mxu0 0
      %534 = vmatprep.subr.bf16.mxu0 0
      %535 = vmatpush1.bf16.msra.mxu0 0
      %536 = vmatprep.subr.bf16.mxu0 0
      %537 = vmatpush1.bf16.msra.mxu0 0
      %538 = vmatprep.subr.bf16.mxu0 0
      %539 = vmatpush1.bf16.msra.mxu0 0
      %540 = vmatprep.subr.bf16.mxu0 0
      %541 = vmatpush1.bf16.msra.mxu0 0
      %542 = vmatprep.subr.bf16.mxu0 0
      %543 = vmatpush1.bf16.msra.mxu0 0
      %544 = vmatprep.subr.bf16.mxu0 %v525
      %545 = vmatpush1.bf16.msra.mxu0 %v522
      %546 = vmatprep.subr.bf16.mxu0 0
      %547 = vmatpush2.bf16.msra.mxu0 0
      %548 = vmatprep.subr.bf16.mxu0 0
      %549 = vmatpush2.bf16.msra.mxu0 0
      %550 = vmatprep.subr.bf16.mxu0 0
      %551 = vmatpush2.bf16.msra.mxu0 0
      %552 = vmatprep.subr.bf16.mxu0 0
      %553 = vmatpush2.bf16.msra.mxu0 0
      %554 = vmatprep.subr.bf16.mxu0 0
      %555 = vmatpush2.bf16.msra.mxu0 0
      %556 = vmatprep.subr.bf16.mxu0 0
      %557 = vmatpush2.bf16.msra.mxu0 0
      %558 = vmatprep.subr.bf16.mxu0 0
      %559 = vmatpush2.bf16.msra.mxu0 0
      %560 = vmatprep.subr.bf16.mxu0 0
      %561 = vmatpush2.bf16.msra.mxu0 0
      %562 = vmatprep.mubr.bf16.mxu0 0
      %563 = vmatmul.mubr.bf16.gmra.mxu0 %v519
      %v564 = vpop.f32.mrf.mxu0
      %v565 = vadd.f32 0.0, %v564
      %v566 = vpop.f32.mrf.mxu0
      %v567 = vadd.f32 0.0, %v566
      %v568 = vpop.f32.mrf.mxu0
      %v569 = vpop.f32.mrf.mxu0
      %570 = vdwg.mxu0
      %571 = vmatprep.subr.bf16.mxu0 0
      %572 = vmatpush1.bf16.msra.mxu0 0
      %573 = vmatprep.subr.bf16.mxu0 0
      %574 = vmatpush1.bf16.msra.mxu0 0
      %575 = vmatprep.subr.bf16.mxu0 0
      %576 = vmatpush1.bf16.msra.mxu0 0
      %577 = vmatprep.subr.bf16.mxu0 0
      %578 = vmatpush1.bf16.msra.mxu0 0
      %579 = vmatprep.subr.bf16.mxu0 0
      %580 = vmatpush1.bf16.msra.mxu0 0
      %581 = vmatprep.subr.bf16.mxu0 0
      %582 = vmatpush1.bf16.msra.mxu0 0
      %583 = vmatprep.subr.bf16.mxu0 0
      %584 = vmatpush1.bf16.msra.mxu0 0
      %585 = vmatprep.subr.bf16.mxu0 0
      %586 = vmatpush1.bf16.msra.mxu0 %v528
      %587 = vmatprep.subr.bf16.mxu0 0
      %588 = vmatpush2.bf16.msra.mxu0 0
      %589 = vmatprep.subr.bf16.mxu0 0
      %590 = vmatpush2.bf16.msra.mxu0 0
      %591 = vmatprep.subr.bf16.mxu0 0
      %592 = vmatpush2.bf16.msra.mxu0 0
      %593 = vmatprep.subr.bf16.mxu0 0
      %594 = vmatpush2.bf16.msra.mxu0 0
      %595 = vmatprep.subr.bf16.mxu0 0
      %596 = vmatpush2.bf16.msra.mxu0 0
      %597 = vmatprep.subr.bf16.mxu0 0
      %598 = vmatpush2.bf16.msra.mxu0 0
      %599 = vmatprep.subr.bf16.mxu0 0
      %600 = vmatpush2.bf16.msra.mxu0 0
      %601 = vmatprep.subr.bf16.mxu0 0
      %602 = vmatpush2.bf16.msra.mxu0 0
      %603 = vmatprep.mubr.bf16.mxu0 0
      %604 = vmatmul.mubr.bf16.gmra.mxu0 %v519
      %v605 = vpop.f32.mrf.mxu0
      %v606 = vadd.f32 0.0, %v605
      %v607 = vpop.f32.mrf.mxu0
      %v608 = vpop.f32.mrf.mxu0
      %v609 = vpop.f32.mrf.mxu0
      %610 = vdwg.mxu0
      %v611 = vadd.f32 %v501, %v565
      %v612 = vadd.f32 %v502, %v567
      %v613 = vadd.f32 %v503, %v606
      %s614 = scalar_lea.vmem %s1, 16
      %v615 = vld [vmem:[%s614] sm:$0xf]
      %616 = vrot.lane.b32.xlu0 %v184, 109
      %v617 = vpop.permute.xlu0 %616
      %618 = vrot.lane.b32.xlu0 %v192, 109
      %v619 = vpop.permute.xlu0 %618
      %620 = vrot.lane.b32.xlu0 %v191, 109
      %v621 = vpop.permute.xlu0 %620
      %622 = vrot.lane.b32.xlu0 %v193, 109
      %v623 = vpop.permute.xlu0 %622
      %vm624 = vcmask 891904
      %v625 = vsel %vm624, %v617, %v619
      %v626 = vsel %vm624, %v619, %v621
      %v627 = vsel %vm624, %v621, %v623
      %v629 = vsel %vm206, %v615, 0
      %v632 = vsel %vm210, %v625, 0
      %v635 = vsel %vm210, %v626, 0
      %v638 = vsel %vm210, %v627, 0
      %640 = vmatprep.subr.bf16.mxu0 0
      %641 = vmatpush1.bf16.msra.mxu0 0
      %642 = vmatprep.subr.bf16.mxu0 0
      %643 = vmatpush1.bf16.msra.mxu0 0
      %644 = vmatprep.subr.bf16.mxu0 0
      %645 = vmatpush1.bf16.msra.mxu0 0
      %646 = vmatprep.subr.bf16.mxu0 0
      %647 = vmatpush1.bf16.msra.mxu0 0
      %648 = vmatprep.subr.bf16.mxu0 0
      %649 = vmatpush1.bf16.msra.mxu0 0
      %650 = vmatprep.subr.bf16.mxu0 0
      %651 = vmatpush1.bf16.msra.mxu0 0
      %652 = vmatprep.subr.bf16.mxu0 0
      %653 = vmatpush1.bf16.msra.mxu0 0
      %654 = vmatprep.subr.bf16.mxu0 %v635
      %655 = vmatpush1.bf16.msra.mxu0 %v632
      %656 = vmatprep.subr.bf16.mxu0 0
      %657 = vmatpush2.bf16.msra.mxu0 0
      %658 = vmatprep.subr.bf16.mxu0 0
      %659 = vmatpush2.bf16.msra.mxu0 0
      %660 = vmatprep.subr.bf16.mxu0 0
      %661 = vmatpush2.bf16.msra.mxu0 0
      %662 = vmatprep.subr.bf16.mxu0 0
      %663 = vmatpush2.bf16.msra.mxu0 0
      %664 = vmatprep.subr.bf16.mxu0 0
      %665 = vmatpush2.bf16.msra.mxu0 0
      %666 = vmatprep.subr.bf16.mxu0 0
      %667 = vmatpush2.bf16.msra.mxu0 0
      %668 = vmatprep.subr.bf16.mxu0 0
      %669 = vmatpush2.bf16.msra.mxu0 0
      %670 = vmatprep.subr.bf16.mxu0 0
      %671 = vmatpush2.bf16.msra.mxu0 0
      %672 = vmatprep.mubr.bf16.mxu0 0
      %673 = vmatmul.mubr.bf16.gmra.mxu0 %v629
      %v674 = vpop.f32.mrf.mxu0
      %v675 = vadd.f32 0.0, %v674
      %v676 = vpop.f32.mrf.mxu0
      %v677 = vadd.f32 0.0, %v676
      %v678 = vpop.f32.mrf.mxu0
      %v679 = vpop.f32.mrf.mxu0
      %680 = vdwg.mxu0
      %681 = vmatprep.subr.bf16.mxu0 0
      %682 = vmatpush1.bf16.msra.mxu0 0
      %683 = vmatprep.subr.bf16.mxu0 0
      %684 = vmatpush1.bf16.msra.mxu0 0
      %685 = vmatprep.subr.bf16.mxu0 0
      %686 = vmatpush1.bf16.msra.mxu0 0
      %687 = vmatprep.subr.bf16.mxu0 0
      %688 = vmatpush1.bf16.msra.mxu0 0
      %689 = vmatprep.subr.bf16.mxu0 0
      %690 = vmatpush1.bf16.msra.mxu0 0
      %691 = vmatprep.subr.bf16.mxu0 0
      %692 = vmatpush1.bf16.msra.mxu0 0
      %693 = vmatprep.subr.bf16.mxu0 0
      %694 = vmatpush1.bf16.msra.mxu0 0
      %695 = vmatprep.subr.bf16.mxu0 0
      %696 = vmatpush1.bf16.msra.mxu0 %v638
      %697 = vmatprep.subr.bf16.mxu0 0
      %698 = vmatpush2.bf16.msra.mxu0 0
      %699 = vmatprep.subr.bf16.mxu0 0
      %700 = vmatpush2.bf16.msra.mxu0 0
      %701 = vmatprep.subr.bf16.mxu0 0
      %702 = vmatpush2.bf16.msra.mxu0 0
      %703 = vmatprep.subr.bf16.mxu0 0
      %704 = vmatpush2.bf16.msra.mxu0 0
      %705 = vmatprep.subr.bf16.mxu0 0
      %706 = vmatpush2.bf16.msra.mxu0 0
      %707 = vmatprep.subr.bf16.mxu0 0
      %708 = vmatpush2.bf16.msra.mxu0 0
      %709 = vmatprep.subr.bf16.mxu0 0
      %710 = vmatpush2.bf16.msra.mxu0 0
      %711 = vmatprep.subr.bf16.mxu0 0
      %712 = vmatpush2.bf16.msra.mxu0 0
      %713 = vmatprep.mubr.bf16.mxu0 0
      %714 = vmatmul.mubr.bf16.gmra.mxu0 %v629
      %v715 = vpop.f32.mrf.mxu0
      %v716 = vadd.f32 0.0, %v715
      %v717 = vpop.f32.mrf.mxu0
      %v718 = vpop.f32.mrf.mxu0
      %v719 = vpop.f32.mrf.mxu0
      %720 = vdwg.mxu0
      %v721 = vadd.f32 %v611, %v675
      %v722 = vadd.f32 %v612, %v677
      %v723 = vadd.f32 %v613, %v716
      %s724 = scalar_lea.vmem %s1, 20
      %v725 = vld [vmem:[%s724] sm:$0xf]
      %726 = vrot.lane.b32.xlu0 %v184, 108
      %v727 = vpop.permute.xlu0 %726
      %728 = vrot.lane.b32.xlu0 %v192, 108
      %v729 = vpop.permute.xlu0 %728
      %730 = vrot.lane.b32.xlu0 %v191, 108
      %v731 = vpop.permute.xlu0 %730
      %732 = vrot.lane.b32.xlu0 %v193, 108
      %v733 = vpop.permute.xlu0 %732
      %vm734 = vcmask 883712
      %v735 = vsel %vm734, %v727, %v729
      %v736 = vsel %vm734, %v729, %v731
      %v737 = vsel %vm734, %v731, %v733
      %v739 = vsel %vm206, %v725, 0
      %v742 = vsel %vm210, %v735, 0
      %v745 = vsel %vm210, %v736, 0
      %v748 = vsel %vm210, %v737, 0
      %750 = vmatprep.subr.bf16.mxu0 0
      %751 = vmatpush1.bf16.msra.mxu0 0
      %752 = vmatprep.subr.bf16.mxu0 0
      %753 = vmatpush1.bf16.msra.mxu0 0
      %754 = vmatprep.subr.bf16.mxu0 0
      %755 = vmatpush1.bf16.msra.mxu0 0
      %756 = vmatprep.subr.bf16.mxu0 0
      %757 = vmatpush1.bf16.msra.mxu0 0
      %758 = vmatprep.subr.bf16.mxu0 0
      %759 = vmatpush1.bf16.msra.mxu0 0
      %760 = vmatprep.subr.bf16.mxu0 0
      %761 = vmatpush1.bf16.msra.mxu0 0
      %762 = vmatprep.subr.bf16.mxu0 0
      %763 = vmatpush1.bf16.msra.mxu0 0
      %764 = vmatprep.subr.bf16.mxu0 %v745
      %765 = vmatpush1.bf16.msra.mxu0 %v742
      %766 = vmatprep.subr.bf16.mxu0 0
      %767 = vmatpush2.bf16.msra.mxu0 0
      %768 = vmatprep.subr.bf16.mxu0 0
      %769 = vmatpush2.bf16.msra.mxu0 0
      %770 = vmatprep.subr.bf16.mxu0 0
      %771 = vmatpush2.bf16.msra.mxu0 0
      %772 = vmatprep.subr.bf16.mxu0 0
      %773 = vmatpush2.bf16.msra.mxu0 0
      %774 = vmatprep.subr.bf16.mxu0 0
      %775 = vmatpush2.bf16.msra.mxu0 0
      %776 = vmatprep.subr.bf16.mxu0 0
      %777 = vmatpush2.bf16.msra.mxu0 0
      %778 = vmatprep.subr.bf16.mxu0 0
      %779 = vmatpush2.bf16.msra.mxu0 0
      %780 = vmatprep.subr.bf16.mxu0 0
      %781 = vmatpush2.bf16.msra.mxu0 0
      %782 = vmatprep.mubr.bf16.mxu0 0
      %783 = vmatmul.mubr.bf16.gmra.mxu0 %v739
      %v784 = vpop.f32.mrf.mxu0
      %v785 = vadd.f32 0.0, %v784
      %v786 = vpop.f32.mrf.mxu0
      %v787 = vadd.f32 0.0, %v786
      %v788 = vpop.f32.mrf.mxu0
      %v789 = vpop.f32.mrf.mxu0
      %790 = vdwg.mxu0
      %791 = vmatprep.subr.bf16.mxu0 0
      %792 = vmatpush1.bf16.msra.mxu0 0
      %793 = vmatprep.subr.bf16.mxu0 0
      %794 = vmatpush1.bf16.msra.mxu0 0
      %795 = vmatprep.subr.bf16.mxu0 0
      %796 = vmatpush1.bf16.msra.mxu0 0
      %797 = vmatprep.subr.bf16.mxu0 0
      %798 = vmatpush1.bf16.msra.mxu0 0
      %799 = vmatprep.subr.bf16.mxu0 0
      %800 = vmatpush1.bf16.msra.mxu0 0
      %801 = vmatprep.subr.bf16.mxu0 0
      %802 = vmatpush1.bf16.msra.mxu0 0
      %803 = vmatprep.subr.bf16.mxu0 0
      %804 = vmatpush1.bf16.msra.mxu0 0
      %805 = vmatprep.subr.bf16.mxu0 0
      %806 = vmatpush1.bf16.msra.mxu0 %v748
      %807 = vmatprep.subr.bf16.mxu0 0
      %808 = vmatpush2.bf16.msra.mxu0 0
      %809 = vmatprep.subr.bf16.mxu0 0
      %810 = vmatpush2.bf16.msra.mxu0 0
      %811 = vmatprep.subr.bf16.mxu0 0
      %812 = vmatpush2.bf16.msra.mxu0 0
      %813 = vmatprep.subr.bf16.mxu0 0
      %814 = vmatpush2.bf16.msra.mxu0 0
      %815 = vmatprep.subr.bf16.mxu0 0
      %816 = vmatpush2.bf16.msra.mxu0 0
      %817 = vmatprep.subr.bf16.mxu0 0
      %818 = vmatpush2.bf16.msra.mxu0 0
      %819 = vmatprep.subr.bf16.mxu0 0
      %820 = vmatpush2.bf16.msra.mxu0 0
      %821 = vmatprep.subr.bf16.mxu0 0
      %822 = vmatpush2.bf16.msra.mxu0 0
      %823 = vmatprep.mubr.bf16.mxu0 0
      %824 = vmatmul.mubr.bf16.gmra.mxu0 %v739
      %v825 = vpop.f32.mrf.mxu0
      %v826 = vadd.f32 0.0, %v825
      %v827 = vpop.f32.mrf.mxu0
      %v828 = vpop.f32.mrf.mxu0
      %v829 = vpop.f32.mrf.mxu0
      %830 = vdwg.mxu0
      %v831 = vadd.f32 %v721, %v785
      %v832 = vadd.f32 %v722, %v787
      %v833 = vadd.f32 %v723, %v826
      %s834 = scalar_lea.vmem %s1, 24
      %v835 = vld [vmem:[%s834] sm:$0xf]
      %836 = vrot.lane.b32.xlu0 %v184, 92
      %v837 = vpop.permute.xlu0 %836
      %838 = vrot.lane.b32.xlu0 %v192, 92
      %v839 = vpop.permute.xlu0 %838
      %840 = vrot.lane.b32.xlu0 %v191, 92
      %v841 = vpop.permute.xlu0 %840
      %842 = vrot.lane.b32.xlu0 %v193, 92
      %v843 = vpop.permute.xlu0 %842
      %vm844 = vcmask 752640
      %v845 = vsel %vm844, %v837, %v839
      %v846 = vsel %vm844, %v839, %v841
      %v847 = vsel %vm844, %v841, %v843
      %v849 = vsel %vm206, %v835, 0
      %v852 = vsel %vm210, %v845, 0
      %v855 = vsel %vm210, %v846, 0
      %v858 = vsel %vm210, %v847, 0
      %860 = vmatprep.subr.bf16.mxu0 0
      %861 = vmatpush1.bf16.msra.mxu0 0
      %862 = vmatprep.subr.bf16.mxu0 0
      %863 = vmatpush1.bf16.msra.mxu0 0
      %864 = vmatprep.subr.bf16.mxu0 0
      %865 = vmatpush1.bf16.msra.mxu0 0
      %866 = vmatprep.subr.bf16.mxu0 0
      %867 = vmatpush1.bf16.msra.mxu0 0
      %868 = vmatprep.subr.bf16.mxu0 0
      %869 = vmatpush1.bf16.msra.mxu0 0
      %870 = vmatprep.subr.bf16.mxu0 0
      %871 = vmatpush1.bf16.msra.mxu0 0
      %872 = vmatprep.subr.bf16.mxu0 0
      %873 = vmatpush1.bf16.msra.mxu0 0
      %874 = vmatprep.subr.bf16.mxu0 %v855
      %875 = vmatpush1.bf16.msra.mxu0 %v852
      %876 = vmatprep.subr.bf16.mxu0 0
      %877 = vmatpush2.bf16.msra.mxu0 0
      %878 = vmatprep.subr.bf16.mxu0 0
      %879 = vmatpush2.bf16.msra.mxu0 0
      %880 = vmatprep.subr.bf16.mxu0 0
      %881 = vmatpush2.bf16.msra.mxu0 0
      %882 = vmatprep.subr.bf16.mxu0 0
      %883 = vmatpush2.bf16.msra.mxu0 0
      %884 = vmatprep.subr.bf16.mxu0 0
      %885 = vmatpush2.bf16.msra.mxu0 0
      %886 = vmatprep.subr.bf16.mxu0 0
      %887 = vmatpush2.bf16.msra.mxu0 0
      %888 = vmatprep.subr.bf16.mxu0 0
      %889 = vmatpush2.bf16.msra.mxu0 0
      %890 = vmatprep.subr.bf16.mxu0 0
      %891 = vmatpush2.bf16.msra.mxu0 0
      %892 = vmatprep.mubr.bf16.mxu0 0
      %893 = vmatmul.mubr.bf16.gmra.mxu0 %v849
      %v894 = vpop.f32.mrf.mxu0
      %v895 = vadd.f32 0.0, %v894
      %v896 = vpop.f32.mrf.mxu0
      %v897 = vadd.f32 0.0, %v896
      %v898 = vpop.f32.mrf.mxu0
      %v899 = vpop.f32.mrf.mxu0
      %900 = vdwg.mxu0
      %901 = vmatprep.subr.bf16.mxu0 0
      %902 = vmatpush1.bf16.msra.mxu0 0
      %903 = vmatprep.subr.bf16.mxu0 0
      %904 = vmatpush1.bf16.msra.mxu0 0
      %905 = vmatprep.subr.bf16.mxu0 0
      %906 = vmatpush1.bf16.msra.mxu0 0
      %907 = vmatprep.subr.bf16.mxu0 0
      %908 = vmatpush1.bf16.msra.mxu0 0
      %909 = vmatprep.subr.bf16.mxu0 0
      %910 = vmatpush1.bf16.msra.mxu0 0
      %911 = vmatprep.subr.bf16.mxu0 0
      %912 = vmatpush1.bf16.msra.mxu0 0
      %913 = vmatprep.subr.bf16.mxu0 0
      %914 = vmatpush1.bf16.msra.mxu0 0
      %915 = vmatprep.subr.bf16.mxu0 0
      %916 = vmatpush1.bf16.msra.mxu0 %v858
      %917 = vmatprep.subr.bf16.mxu0 0
      %918 = vmatpush2.bf16.msra.mxu0 0
      %919 = vmatprep.subr.bf16.mxu0 0
      %920 = vmatpush2.bf16.msra.mxu0 0
      %921 = vmatprep.subr.bf16.mxu0 0
      %922 = vmatpush2.bf16.msra.mxu0 0
      %923 = vmatprep.subr.bf16.mxu0 0
      %924 = vmatpush2.bf16.msra.mxu0 0
      %925 = vmatprep.subr.bf16.mxu0 0
      %926 = vmatpush2.bf16.msra.mxu0 0
      %927 = vmatprep.subr.bf16.mxu0 0
      %928 = vmatpush2.bf16.msra.mxu0 0
      %929 = vmatprep.subr.bf16.mxu0 0
      %930 = vmatpush2.bf16.msra.mxu0 0
      %931 = vmatprep.subr.bf16.mxu0 0
      %932 = vmatpush2.bf16.msra.mxu0 0
      %933 = vmatprep.mubr.bf16.mxu0 0
      %934 = vmatmul.mubr.bf16.gmra.mxu0 %v849
      %v935 = vpop.f32.mrf.mxu0
      %v936 = vadd.f32 0.0, %v935
      %v937 = vpop.f32.mrf.mxu0
      %v938 = vpop.f32.mrf.mxu0
      %v939 = vpop.f32.mrf.mxu0
      %940 = vdwg.mxu0
      %v941 = vadd.f32 %v831, %v895
      %v942 = vadd.f32 %v832, %v897
      %v943 = vadd.f32 %v833, %v936
      %s944 = scalar_lea.vmem %s1, 28
      %v945 = vld [vmem:[%s944] sm:$0xf]
      %946 = vrot.lane.b32.xlu0 %v184, 91
      %v947 = vpop.permute.xlu0 %946
      %948 = vrot.lane.b32.xlu0 %v192, 91
      %v949 = vpop.permute.xlu0 %948
      %950 = vrot.lane.b32.xlu0 %v191, 91
      %v951 = vpop.permute.xlu0 %950
      %952 = vrot.lane.b32.xlu0 %v193, 91
      %v953 = vpop.permute.xlu0 %952
      %vm954 = vcmask 744448
      %v955 = vsel %vm954, %v947, %v949
      %v956 = vsel %vm954, %v949, %v951
      %v957 = vsel %vm954, %v951, %v953
      %v959 = vsel %vm206, %v945, 0
      %v962 = vsel %vm210, %v955, 0
      %v965 = vsel %vm210, %v956, 0
      %v968 = vsel %vm210, %v957, 0
      %970 = vmatprep.subr.bf16.mxu0 0
      %971 = vmatpush1.bf16.msra.mxu0 0
      %972 = vmatprep.subr.bf16.mxu0 0
      %973 = vmatpush1.bf16.msra.mxu0 0
      %974 = vmatprep.subr.bf16.mxu0 0
      %975 = vmatpush1.bf16.msra.mxu0 0
      %976 = vmatprep.subr.bf16.mxu0 0
      %977 = vmatpush1.bf16.msra.mxu0 0
      %978 = vmatprep.subr.bf16.mxu0 0
      %979 = vmatpush1.bf16.msra.mxu0 0
      %980 = vmatprep.subr.bf16.mxu0 0
      %981 = vmatpush1.bf16.msra.mxu0 0
      %982 = vmatprep.subr.bf16.mxu0 0
      %983 = vmatpush1.bf16.msra.mxu0 0
      %984 = vmatprep.subr.bf16.mxu0 %v965
      %985 = vmatpush1.bf16.msra.mxu0 %v962
      %986 = vmatprep.subr.bf16.mxu0 0
      %987 = vmatpush2.bf16.msra.mxu0 0
      %988 = vmatprep.subr.bf16.mxu0 0
      %989 = vmatpush2.bf16.msra.mxu0 0
      %990 = vmatprep.subr.bf16.mxu0 0
      %991 = vmatpush2.bf16.msra.mxu0 0
      %992 = vmatprep.subr.bf16.mxu0 0
      %993 = vmatpush2.bf16.msra.mxu0 0
      %994 = vmatprep.subr.bf16.mxu0 0
      %995 = vmatpush2.bf16.msra.mxu0 0
      %996 = vmatprep.subr.bf16.mxu0 0
      %997 = vmatpush2.bf16.msra.mxu0 0
      %998 = vmatprep.subr.bf16.mxu0 0
      %999 = vmatpush2.bf16.msra.mxu0 0
      %1000 = vmatprep.subr.bf16.mxu0 0
      %1001 = vmatpush2.bf16.msra.mxu0 0
      %1002 = vmatprep.mubr.bf16.mxu0 0
      %1003 = vmatmul.mubr.bf16.gmra.mxu0 %v959
      %v1004 = vpop.f32.mrf.mxu0
      %v1005 = vadd.f32 0.0, %v1004
      %v1006 = vpop.f32.mrf.mxu0
      %v1007 = vadd.f32 0.0, %v1006
      %v1008 = vpop.f32.mrf.mxu0
      %v1009 = vpop.f32.mrf.mxu0
      %1010 = vdwg.mxu0
      %1011 = vmatprep.subr.bf16.mxu0 0
      %1012 = vmatpush1.bf16.msra.mxu0 0
      %1013 = vmatprep.subr.bf16.mxu0 0
      %1014 = vmatpush1.bf16.msra.mxu0 0
      %1015 = vmatprep.subr.bf16.mxu0 0
      %1016 = vmatpush1.bf16.msra.mxu0 0
      %1017 = vmatprep.subr.bf16.mxu0 0
      %1018 = vmatpush1.bf16.msra.mxu0 0
      %1019 = vmatprep.subr.bf16.mxu0 0
      %1020 = vmatpush1.bf16.msra.mxu0 0
      %1021 = vmatprep.subr.bf16.mxu0 0
      %1022 = vmatpush1.bf16.msra.mxu0 0
      %1023 = vmatprep.subr.bf16.mxu0 0
      %1024 = vmatpush1.bf16.msra.mxu0 0
      %1025 = vmatprep.subr.bf16.mxu0 0
      %1026 = vmatpush1.bf16.msra.mxu0 %v968
      %1027 = vmatprep.subr.bf16.mxu0 0
      %1028 = vmatpush2.bf16.msra.mxu0 0
      %1029 = vmatprep.subr.bf16.mxu0 0
      %1030 = vmatpush2.bf16.msra.mxu0 0
      %1031 = vmatprep.subr.bf16.mxu0 0
      %1032 = vmatpush2.bf16.msra.mxu0 0
      %1033 = vmatprep.subr.bf16.mxu0 0
      %1034 = vmatpush2.bf16.msra.mxu0 0
      %1035 = vmatprep.subr.bf16.mxu0 0
      %1036 = vmatpush2.bf16.msra.mxu0 0
      %1037 = vmatprep.subr.bf16.mxu0 0
      %1038 = vmatpush2.bf16.msra.mxu0 0
      %1039 = vmatprep.subr.bf16.mxu0 0
      %1040 = vmatpush2.bf16.msra.mxu0 0
      %1041 = vmatprep.subr.bf16.mxu0 0
      %1042 = vmatpush2.bf16.msra.mxu0 0
      %1043 = vmatprep.mubr.bf16.mxu0 0
      %1044 = vmatmul.mubr.bf16.gmra.mxu0 %v959
      %v1045 = vpop.f32.mrf.mxu0
      %v1046 = vadd.f32 0.0, %v1045
      %v1047 = vpop.f32.mrf.mxu0
      %v1048 = vpop.f32.mrf.mxu0
      %v1049 = vpop.f32.mrf.mxu0
      %1050 = vdwg.mxu0
      %v1051 = vadd.f32 %v941, %v1005
      %v1052 = vadd.f32 %v942, %v1007
      %v1053 = vadd.f32 %v943, %v1046
      %s1054 = scalar_lea.vmem %s1, 32
      %v1055 = vld [vmem:[%s1054] sm:$0xf]
      %1056 = vrot.lane.b32.xlu0 %v184, 90
      %v1057 = vpop.permute.xlu0 %1056
      %1058 = vrot.lane.b32.xlu0 %v192, 90
      %v1059 = vpop.permute.xlu0 %1058
      %1060 = vrot.lane.b32.xlu0 %v191, 90
      %v1061 = vpop.permute.xlu0 %1060
      %1062 = vrot.lane.b32.xlu0 %v193, 90
      %v1063 = vpop.permute.xlu0 %1062
      %vm1064 = vcmask 736256
      %v1065 = vsel %vm1064, %v1057, %v1059
      %v1066 = vsel %vm1064, %v1059, %v1061
      %v1067 = vsel %vm1064, %v1061, %v1063
      %v1069 = vsel %vm206, %v1055, 0
      %v1072 = vsel %vm210, %v1065, 0
      %v1075 = vsel %vm210, %v1066, 0
      %v1078 = vsel %vm210, %v1067, 0
      %1080 = vmatprep.subr.bf16.mxu0 0
      %1081 = vmatpush1.bf16.msra.mxu0 0
      %1082 = vmatprep.subr.bf16.mxu0 0
      %1083 = vmatpush1.bf16.msra.mxu0 0
      %1084 = vmatprep.subr.bf16.mxu0 0
      %1085 = vmatpush1.bf16.msra.mxu0 0
      %1086 = vmatprep.subr.bf16.mxu0 0
      %1087 = vmatpush1.bf16.msra.mxu0 0
      %1088 = vmatprep.subr.bf16.mxu0 0
      %1089 = vmatpush1.bf16.msra.mxu0 0
      %1090 = vmatprep.subr.bf16.mxu0 0
      %1091 = vmatpush1.bf16.msra.mxu0 0
      %1092 = vmatprep.subr.bf16.mxu0 0
      %1093 = vmatpush1.bf16.msra.mxu0 0
      %1094 = vmatprep.subr.bf16.mxu0 %v1075
      %1095 = vmatpush1.bf16.msra.mxu0 %v1072
      %1096 = vmatprep.subr.bf16.mxu0 0
      %1097 = vmatpush2.bf16.msra.mxu0 0
      %1098 = vmatprep.subr.bf16.mxu0 0
      %1099 = vmatpush2.bf16.msra.mxu0 0
      %1100 = vmatprep.subr.bf16.mxu0 0
      %1101 = vmatpush2.bf16.msra.mxu0 0
      %1102 = vmatprep.subr.bf16.mxu0 0
      %1103 = vmatpush2.bf16.msra.mxu0 0
      %1104 = vmatprep.subr.bf16.mxu0 0
      %1105 = vmatpush2.bf16.msra.mxu0 0
      %1106 = vmatprep.subr.bf16.mxu0 0
      %1107 = vmatpush2.bf16.msra.mxu0 0
      %1108 = vmatprep.subr.bf16.mxu0 0
      %1109 = vmatpush2.bf16.msra.mxu0 0
      %1110 = vmatprep.subr.bf16.mxu0 0
      %1111 = vmatpush2.bf16.msra.mxu0 0
      %1112 = vmatprep.mubr.bf16.mxu0 0
      %1113 = vmatmul.mubr.bf16.gmra.mxu0 %v1069
      %v1114 = vpop.f32.mrf.mxu0
      %v1115 = vadd.f32 0.0, %v1114
      %v1116 = vpop.f32.mrf.mxu0
      %v1117 = vadd.f32 0.0, %v1116
      %v1118 = vpop.f32.mrf.mxu0
      %v1119 = vpop.f32.mrf.mxu0
      %1120 = vdwg.mxu0
      %1121 = vmatprep.subr.bf16.mxu0 0
      %1122 = vmatpush1.bf16.msra.mxu0 0
      %1123 = vmatprep.subr.bf16.mxu0 0
      %1124 = vmatpush1.bf16.msra.mxu0 0
      %1125 = vmatprep.subr.bf16.mxu0 0
      %1126 = vmatpush1.bf16.msra.mxu0 0
      %1127 = vmatprep.subr.bf16.mxu0 0
      %1128 = vmatpush1.bf16.msra.mxu0 0
      %1129 = vmatprep.subr.bf16.mxu0 0
      %1130 = vmatpush1.bf16.msra.mxu0 0
      %1131 = vmatprep.subr.bf16.mxu0 0
      %1132 = vmatpush1.bf16.msra.mxu0 0
      %1133 = vmatprep.subr.bf16.mxu0 0
      %1134 = vmatpush1.bf16.msra.mxu0 0
      %1135 = vmatprep.subr.bf16.mxu0 0
      %1136 = vmatpush1.bf16.msra.mxu0 %v1078
      %1137 = vmatprep.subr.bf16.mxu0 0
      %1138 = vmatpush2.bf16.msra.mxu0 0
      %1139 = vmatprep.subr.bf16.mxu0 0
      %1140 = vmatpush2.bf16.msra.mxu0 0
      %1141 = vmatprep.subr.bf16.mxu0 0
      %1142 = vmatpush2.bf16.msra.mxu0 0
      %1143 = vmatprep.subr.bf16.mxu0 0
      %1144 = vmatpush2.bf16.msra.mxu0 0
      %1145 = vmatprep.subr.bf16.mxu0 0
      %1146 = vmatpush2.bf16.msra.mxu0 0
      %1147 = vmatprep.subr.bf16.mxu0 0
      %1148 = vmatpush2.bf16.msra.mxu0 0
      %1149 = vmatprep.subr.bf16.mxu0 0
      %1150 = vmatpush2.bf16.msra.mxu0 0
      %1151 = vmatprep.subr.bf16.mxu0 0
      %1152 = vmatpush2.bf16.msra.mxu0 0
      %1153 = vmatprep.mubr.bf16.mxu0 0
      %1154 = vmatmul.mubr.bf16.gmra.mxu0 %v1069
      %v1155 = vpop.f32.mrf.mxu0
      %v1156 = vadd.f32 0.0, %v1155
      %v1157 = vpop.f32.mrf.mxu0
      %v1158 = vpop.f32.mrf.mxu0
      %v1159 = vpop.f32.mrf.mxu0
      %1160 = vdwg.mxu0
      %v1161 = vadd.f32 %v1051, %v1115
      %v1162 = vadd.f32 %v1052, %v1117
      %v1163 = vadd.f32 %v1053, %v1156
      %v1164 = vld [vmem:[%s2] sm:$0x7]
      %v1166 = vlaneseq
      %v1167 = vshrl.u32 %v1166, 7
      %v1168 = vsub.s32 0, %v1167
      %v1169 = vrot.slane %v1164, %v1168
      %v1170 = vlaneseq
      %v1171 = vshrl.u32 %v1170, 7
      %v1172 = vsub.s32 1, %v1171
      %v1173 = vrot.slane %v1164, %v1172
      %v1174 = vlaneseq
      %v1175 = vshrl.u32 %v1174, 7
      %v1176 = vsub.s32 2, %v1175
      %v1177 = vrot.slane %v1164, %v1176
      %v1181 = vmul.f32 %v1161, %v1169
      %v1182 = vmul.f32 %v1162, %v1173
      %v1183 = vmul.f32 %v1163, %v1177
      %v1184 = vadd.f32 %v1181, %v1182
      %v1185 = vadd.f32 %v1184, %v1183
      %1186 = vadd.xlane.f32.xlu0 %v1185
      %v1187 = vpop.xlane.xlu0 %1186
      %v1188 = vmul.f32 %v1187, 0.00390625
      %v1189 = vmul.f32 %v1181, %v1181
      %v1190 = vmul.f32 %v1182, %v1182
      %v1191 = vmul.f32 %v1183, %v1183
      %v1192 = vadd.f32 %v1189, %v1190
      %v1193 = vadd.f32 %v1192, %v1191
      %1194 = vadd.xlane.f32.xlu0 %v1193
      %v1195 = vpop.xlane.xlu0 %1194
      %v1196 = vmul.f32 %v1195, 0.00390625
      %v1197 = vmul.f32 %v1188, %v1188
      %v1198 = vsub.f32 %v1196, %v1197
      %v1199 = vmax.f32 %v1198, 0.0
      %v1200 = vsub.f32 %v1161, %v1188
      %v1201 = vsub.f32 %v1162, %v1188
      %v1202 = vsub.f32 %v1163, %v1188
      %v1203 = vadd.f32 %v1199, 1e-05
      %v1204 = vrsqrt.pop %v1203
      %v1205 = vmul.f32 %v1200, %v1204
      %v1206 = vmul.f32 %v1201, %v1204
      %v1207 = vmul.f32 %v1202, %v1204
      %1208 = vst [vmem:[%s170] sm:$0xff] %v1205
      %1209 = vst [vmem:[%s170 + $0x8] sm:$0xff] %v1206
      %1210 = vst [vmem:[%s170 + $0x10] sm:$0xff] %v1207
      %p1211 = scmp.lt.s32.totalorder %s14, 1
      %s1212 = scalar_select %p1211, %s14, 1
      %s1213 = smul.addr %s1212, 3
      %s1214 = smul.addr %s1213, 8
      %s1215 = scalar_lea.vmem %s3, %s1214
      // Predicated region
      $region33: #{conv_instance_norm2d.1} parent=31 // pred_check
        %p1216 = pneg %p100
      $region34: #{conv_instance_norm2d.1} parent=31 // pred_check_branch
        %1218 = sbr.rel (%p1216) target = $region36
      $region35: #{conv_instance_norm2d.1} parent=31 // pred_region
        _
      $region36: #{conv_instance_norm2d.1} parent=31 // pred_fallthru
        _
    $region32: #{conv_instance_norm2d.1} parent=5 // pred_fallthru
      _
    %p1219 = scmp.le.s32.totalorder 2, %s9
    // Predicated region
    $region37: #{conv_instance_norm2d.1} parent=5 // pred_check
      %p1220 = pneg %p1219
    $region38: #{conv_instance_norm2d.1} parent=5 // pred_check_branch
      %1222 = sbr.rel (%p1220) target = $region40
    $region39: #{conv_instance_norm2d.1} parent=5 // pred_region
      %s1223 = ssub.s32 %s9, 2
      // Predicated region
      $region41: #{conv_instance_norm2d.1} parent=39 // pred_check
        %p1224 = pneg %p106
      $region42: #{conv_instance_norm2d.1} parent=39 // pred_check_branch
        %1226 = sbr.rel (%p1224) target = $region44
      $region43: #{conv_instance_norm2d.1} parent=39 // pred_region
        %p1227 = scmp.lt.s32.totalorder %s15, 1
        %s1228 = scalar_select %p1227, %s15, 1
        %s1229 = smul.addr %s1228, 3
        %s1230 = smul.addr %s1229, 8
        %s1231 = scalar_lea.vmem %s3, %s1230
      $region44: #{conv_instance_norm2d.1} parent=39 // pred_fallthru
        _
    $region40: #{conv_instance_norm2d.1} parent=5 // pred_fallthru
      _
  $region6: #{conv_instance_norm2d.1} parent=0 // loop_footer
    %s13 = sadd.s32 1, %s9
  $region7: #{conv_instance_norm2d.1} parent=0 // loop_footer_branch
    %8 = sbr.rel target = $region3
  $region8: #{conv_instance_norm2d.1} parent=0 // loop_exit
    _

</llo_original>
